<compile_context>
chip_gen: v7x
topology: tpu7x:2x2x1
jax: 0.10.0
libtpu: 0.0.40
codegen_flags: <defaults>
</compile_context>

<pallas_src>
import functools

import jax
import jax.numpy as jnp
from jax.experimental import pallas as pl
from jax.experimental.pallas import tpu as pltpu

LANES = 128        # lane width of the (rows, 128) lane-dense view
MAX_TILE_M = 4096  # rows per block: 4096 x 128 f32 = 2 MiB / block


def _elementwise_loss(x, label, use_lsgan):
    """Per-element loss vs a constant broadcast label (f32 in, f32 out)."""
    if use_lsgan:                                   # nn.MSELoss term
        d = x - label
        return d * d
    # nn.BCELoss term, log clamped at -100 like torch.  Specialized for the
    # default labels so only one EUP log per element runs on the hot paths.
    if label == 1.0:
        return -jnp.maximum(jnp.log(x), -100.0)
    if label == 0.0:
        return -jnp.maximum(jnp.log(1.0 - x), -100.0)
    log_x = jnp.maximum(jnp.log(x), -100.0)
    log_1mx = jnp.maximum(jnp.log(1.0 - x), -100.0)
    return -(label * log_x + (1.0 - label) * log_1mx)


def _gan_loss_kernel(x_ref, out_ref, *, label, rows, tile_m, use_lsgan,
                     needs_mask):
    """One grid step: fold a (tile_m, 128) tile into an (8, 128) partial sum."""
    i = pl.program_id(0)
    x = x_ref[...].astype(jnp.float32)
    part = _elementwise_loss(x, label, use_lsgan)          # (tile_m, 128) f32

    def write(p):
        # Leading-axis sum lowers to plain vreg-wise VPU adds (no XLU); the
        # only cross-lane reduction happens once, in the wrapper's jnp.sum.
        folded = p.reshape(tile_m // 8, 8, LANES).sum(axis=0)
        out_ref[...] = folded.reshape(1, 8, LANES)

    if needs_mask:
        last = pl.num_programs(0) - 1

        @pl.when(i != last)
        def _():
            write(part)

        @pl.when(i == last)
        def _():
            # Only the final block can contain out-of-bounds rows (Pallas pads
            # the partial block with undefined data).  Row-index compare only:
            # i*tile_m + r stays well inside int32 for any tensor that fits in
            # HBM (rows = n/128).  Keep jnp.where (a select) rather than
            # arithmetic masking so NaN/Inf from log() of the garbage tail
            # cannot propagate into the sum.
            r = jax.lax.broadcasted_iota(jnp.int32, part.shape, 0)
            valid = (i * tile_m + r) < rows
            write(jnp.where(valid, part, 0.0))
    else:
        write(part)


def gan_loss(x, target_is_real, *, use_lsgan=True,
             target_real_label=1.0, target_fake_label=0.0,
             max_tile_m=MAX_TILE_M):
    """Pallas implementation of GANLoss.forward(input, target_is_real)."""
    label = float(target_real_label) if target_is_real else float(target_fake_label)
    n = int(x.size)

    flat = x.reshape(-1)                 # bitcast for contiguous inputs
    rows = n // LANES                    # full lane-dense rows
    aligned = rows * LANES

    total = jnp.float32(0.0)

    if rows > 0:
        # Zero-copy (rows, 128) view of the 128-aligned prefix (no jnp.pad).
        # TODO(synk): for ragged sizes flat[:aligned] may still materialize a
        # prefix copy in XLA; an ANY-memspace manual-DMA path would avoid it.
        prefix = flat if aligned == n else flat[:aligned]
        x2d = prefix.reshape(rows, LANES)

        # Sublane packing granularity: f32 -> 8, bf16/f16 -> 16, int8 -> 32.
        itemsize = jnp.dtype(x.dtype).itemsize
        pack = 8 * max(1, 4 // itemsize)
        tile_m = min(max_tile_m, ((rows + pack - 1) // pack) * pack)
        nb = pl.cdiv(rows, tile_m)
        needs_mask = (nb * tile_m) != rows

        kernel = functools.partial(
            _gan_loss_kernel, label=label, rows=rows, tile_m=tile_m,
            use_lsgan=use_lsgan, needs_mask=needs_mask)

        partials = pl.pallas_call(
            kernel,
            out_shape=jax.ShapeDtypeStruct((nb, 8, LANES), jnp.float32),
            grid_spec=pltpu.PrefetchScalarGridSpec(
                num_scalar_prefetch=0,
                grid=(nb,),
                in_specs=[pl.BlockSpec((tile_m, LANES), lambda i: (i, 0))],
                out_specs=pl.BlockSpec((1, 8, LANES), lambda i: (i, 0, 0)),
            ),
            # Blocks are independent partial sums -> the grid axis is genuinely
            # parallel; on v7x megacore shards it across both TensorCores.
            compiler_params=pltpu.CompilerParams(
                dimension_semantics=("parallel",)),
        )(x2d)
        total = jnp.sum(partials)

    if aligned != n:
        # < 128-element ragged tail: tiny plain-JAX reduction in the wrapper.
        tail = flat[aligned:].astype(jnp.float32)
        total = total + jnp.sum(_elementwise_loss(tail, label, use_lsgan))

    return total / n


if __name__ == "__main__":
    key = jax.random.PRNGKey(0)
    k1, k2, k3 = jax.random.split(key, 3)

    # Small PatchGAN-style discriminator output, NCHW.
    x = jax.random.normal(k1, (2, 4, 16, 16), dtype=jnp.float32)

    # --- LSGAN (MSE) path, real and fake targets ---
    loss_real = jax.block_until_ready(gan_loss(x, True, use_lsgan=True))
    loss_fake = jax.block_until_ready(gan_loss(x, False, use_lsgan=True))
    assert jnp.allclose(loss_real, jnp.mean((x - 1.0) ** 2), rtol=1e-5, atol=1e-5)
    assert jnp.allclose(loss_fake, jnp.mean(x ** 2), rtol=1e-5, atol=1e-5)

    # --- BCE path (input must be probabilities, as nn.BCELoss expects) ---
    p = jax.nn.sigmoid(jax.random.normal(k2, (2, 4, 16, 16), dtype=jnp.float32))
    bce_real = jax.block_until_ready(gan_loss(p, True, use_lsgan=False))
    bce_fake = jax.block_until_ready(gan_loss(p, False, use_lsgan=False))
    assert jnp.allclose(bce_real, jnp.mean(-jnp.log(p)), rtol=1e-5, atol=1e-5)
    assert jnp.allclose(bce_fake, jnp.mean(-jnp.log(1.0 - p)), rtol=1e-5, atol=1e-5)

    # --- Ragged element count: in-kernel last-block mask + <128-elem tail ---
    xr = jax.random.normal(k3, (2, 3, 15, 15), dtype=jnp.float32)
    loss_r = jax.block_until_ready(gan_loss(xr, True, use_lsgan=True))
    assert jnp.allclose(loss_r, jnp.mean((xr - 1.0) ** 2), rtol=1e-5, atol=1e-5)

    # --- Label smoothing + ragged size (BCE general-label branch) ---
    pr = jax.nn.sigmoid(xr)
    smooth = jax.block_until_ready(
        gan_loss(pr, True, use_lsgan=False, target_real_label=0.9))
    ref_smooth = jnp.mean(-(0.9 * jnp.log(pr) + 0.1 * jnp.log(1.0 - pr)))
    assert jnp.allclose(smooth, ref_smooth, rtol=1e-5, atol=1e-5)

    print("KERNEL_OK")
</pallas_src>

<mosaic_0001>
module attributes {stable_mosaic.version = 11 : i64} {
  func.func @_gan_loss_kernel(%arg0: i32, %arg1: memref<16x128xf32, #tpu.memory_space<vmem>>, %arg2: memref<1x8x128xf32, #tpu.memory_space<vmem>>) attributes {dimension_semantics = [#tpu.dimension_semantics<parallel>], iteration_bounds = array<i64: 1>, scalar_prefetch = 0 : i64, scratch_operands = 0 : i64, tpu.core_type = #tpu.core_type<tc>, window_params = [{transform_indices = @transform_0, window_bounds = array<i64: 16, 128>}, {transform_indices = @transform_1, window_bounds = array<i64: 1, 8, 128>}]} {
    %c0 = arith.constant 0 : index
    %c0_0 = arith.constant 0 : index
    %0 = vector.load %arg1[%c0, %c0_0] : memref<16x128xf32, #tpu.memory_space<vmem>>, vector<16x128xf32>
    %cst = arith.constant 1.000000e+00 : f32
    %1 = vector.broadcast %cst : f32 to vector<16x128xf32>
    %2 = arith.subf %0, %1 : vector<16x128xf32>
    %3 = arith.mulf %2, %2 : vector<16x128xf32>
    %4 = vector.shape_cast %3 : vector<16x128xf32> to vector<2x8x128xf32>
    %cst_1 = arith.constant dense<0.000000e+00> : vector<8x128xf32>
    %5 = vector.multi_reduction <add>, %4, %cst_1 [0] : vector<2x8x128xf32> to vector<8x128xf32>
    %6 = vector.shape_cast %5 : vector<8x128xf32> to vector<1x8x128xf32>
    %c0_2 = arith.constant 0 : index
    %c0_3 = arith.constant 0 : index
    %c0_4 = arith.constant 0 : index
    %7 = vector.load %arg2[%c0_2, %c0_3, %c0_4] : memref<1x8x128xf32, #tpu.memory_space<vmem>>, vector<1x8x128xf32>
    tpu.vector_store %arg2[%c0_2, %c0_3, %c0_4], %6 {strides = array<i32>} : memref<1x8x128xf32, #tpu.memory_space<vmem>>, vector<1x8x128xf32>,
    return
  }
  func.func @transform_0(%arg0: i32) -> (i32, i32) {
    %c0_i32 = arith.constant 0 : i32
    %c0_i32_0 = arith.constant 0 : i32
    return %arg0, %c0_i32 : i32, i32
  }
  func.func @transform_1(%arg0: i32) -> (i32, i32, i32) {
    %c0_i32 = arith.constant 0 : i32
    %c0_i32_0 = arith.constant 0 : i32
    %c0_i32_1 = arith.constant 0 : i32
    return %arg0, %c0_i32, %c0_i32_0 : i32, i32, i32
  }
}

</mosaic_0001>

<llo_original>
// kernel: tpu_custom_call.1
$region0: #{tpu_custom_call.1}
  #allocation0 [shape = 'u32[]', space=smem, size = 0x4, offset = 0x4, fixed_abs, tag = 'smem constant byte address 0x4 - core index']
  #allocation1 [shape = 'u32[144,128]{1,0:T(1,128)}', space=vmem, size = 0x12000, scoped, tag = 'internal scratch']
  %s0 = inlined_call_operand.hbm [shape: f32[16,128], index: 0, kind: input, shape index: {}]
  %s1 = inlined_call_operand.hbm [shape: f32[1,8,128], index: 1, kind: output, shape index: {}]
  %s2 = sld [smem:[#allocation0]]
  $region18: #{tpu_custom_call.1} parent=0
    _
  %s4 = ssub.s32 1, %s2
  %s5 = scalar_select 0, %s4, %s2
  $region1: #{tpu_custom_call.1} parent=0
    #allocation2 [shape = 'u8[8192]{0}', space=vmem, size = 0x2000, scoped, tag = 'input window, operand 0, single buffered']
    #allocation3 [shape = 's32[1]{0}', space=sflag, size = 0x4, scoped, tag = 'scoped memory for tpu_custom_call.1']
    #allocation4 [shape = 's32[1]{0}', space=sflag, size = 0x4, scoped, tag = 'scoped memory for tpu_custom_call.1']
    #allocation5 [shape = 'u8[4096]{0}', space=vmem, size = 0x1000, scoped, tag = 'output window, operand 0, single buffered']
    %6 = vsyncpa [#allocation3], 0
    %7 = vsyncpa [#allocation4], 0
    // Predicated region
    $region2: #{tpu_custom_call.1} parent=1 // pred_check
      _
    $region3: #{tpu_custom_call.1} parent=1 // pred_check_branch
      %9 = sbr.rel (0) target = $region5
    $region4: #{tpu_custom_call.1} parent=1 // pred_region
      %s11 = ssub.s32 256, 256
      %12 = vsyncadd [#allocation3], %s11
      %s13 = sshll.u32 [#allocation2], 4
      %s14 = int_to_ptr.vmem [resolvable:$true] %s13
      %19 = dma.hbm_to_vmem [thread:$0]  %s0, 256, %s14, [#allocation3], 128, 128, 8
    $region5: #{tpu_custom_call.1} parent=1 // pred_fallthru
      _
    // Predicated region
    $region6: #{tpu_custom_call.1} parent=1 // pred_check
      _
    $region7: #{tpu_custom_call.1} parent=1 // pred_check_branch
      %21 = sbr.rel (0) target = $region9
    $region8: #{tpu_custom_call.1} parent=1 // pred_region
      %22 = dma.done [#allocation3], 256
    $region9: #{tpu_custom_call.1} parent=1 // pred_fallthru
      _
    %v23 = vld [vmem:[#allocation2] sm:$0xff]
    %v24 = vld [vmem:[#allocation2 + $0x8] sm:$0xff]
    %v25 = vsub.f32 %v23, 1.0
    %v26 = vsub.f32 %v24, 1.0
    %v27 = vmul.f32 %v25, %v25
    %v28 = vmul.f32 %v26, %v26
    %v29 = vadd.f32 %v27, %v28
    %30 = vst [vmem:[#allocation5] sm:$0xff] %v29
    // Predicated region
    $region10: #{tpu_custom_call.1} parent=1 // pred_check
      _
    $region11: #{tpu_custom_call.1} parent=1 // pred_check_branch
      %32 = sbr.rel (0) target = $region13
    $region12: #{tpu_custom_call.1} parent=1 // pred_region
      %s34 = ssub.s32 128, 128
      %35 = vsyncadd [#allocation4], %s34
      %s37 = sshll.u32 [#allocation5], 4
      %s38 = int_to_ptr.vmem [resolvable:$true] %s37
      %40 = dma.vmem_to_hbm [thread:$0]  %s38, 128, %s1, [#allocation4]
    $region13: #{tpu_custom_call.1} parent=1 // pred_fallthru
      _
    // Predicated region
    $region14: #{tpu_custom_call.1} parent=1 // pred_check
      _
    $region15: #{tpu_custom_call.1} parent=1 // pred_check_branch
      %42 = sbr.rel (0) target = $region17
    $region16: #{tpu_custom_call.1} parent=1 // pred_region
      %43 = dma.done [#allocation4], 128
    $region17: #{tpu_custom_call.1} parent=1 // pred_fallthru
      _
    %44 = vsyncpa [#allocation3], 1
    %45 = vsyncpa [#allocation4], 1

</llo_original>
